<compile_context>
chip_gen: v6e
topology: v6e:2x2x1
jax: 0.10.0
libtpu: 0.0.40
codegen_flags: <defaults>
</compile_context>

<pallas_src>
import math

import jax
import jax.numpy as jnp
from jax.experimental import pallas as pl
from jax.experimental.pallas import tpu as pltpu


def _taaf_kernel(x_ref, p_ref, o_ref):
    # x_ref: (tile_rows, W)   p_ref: (4, W)   o_ref: (tile_rows, W)
    x = x_ref[...].astype(jnp.float32)
    alpha_b = p_ref[0:1, :]            # (1, W) -> broadcasts over rows
    beta_b = p_ref[1:2, :]
    alpha_t = p_ref[2:3, :]
    beta_t = p_ref[3:4, :]

    h = jnp.tanh(alpha_b * x + beta_b)            # bottom affine + tanh (EUP)
    o_ref[...] = (alpha_t * h + beta_t).astype(o_ref.dtype)   # top affine


def _round_up(a, b):
    return ((a + b - 1) // b) * b


def taaf_forward(x, alpha_bottom, beta_bottom, alpha_top, beta_top,
                 *, target_tile_bytes=2 << 20):
    """x: (..., D). Params: (D,) float32. Returns same shape/dtype as x."""
    orig_shape = x.shape
    D = orig_shape[-1]
    x2 = x.reshape(-1, D)
    R = x2.shape[0]
    itemsize = jnp.dtype(x.dtype).itemsize

    # --- lane-dense folding: pack f consecutive rows into the lane dim ---
    f = 128 // math.gcd(D, 128)        # smallest f with (f*D) % 128 == 0
    W = f * D

    # --- tile sizing: ~target_tile_bytes per input tile, multiple of 8 rows ---
    rows_needed = pl.cdiv(R, f)                        # folded rows required
    tile_rows = max(8, (target_tile_bytes // (W * itemsize)) // 8 * 8)
    tile_rows = min(tile_rows, _round_up(rows_needed, 8))
    rows_padded = _round_up(rows_needed, tile_rows)    # folded rows after pad

    # --- pad flat rows with zeros and fold into (rows_padded, W) ---
    R_pad = rows_padded * f
    if R_pad != R:
        x2 = jnp.pad(x2, ((0, R_pad - R), (0, 0)))
    xf = x2.reshape(rows_padded, W)

    # --- pack params: (4, D) stacked, tiled f-x along lanes -> (4, W) ---
    params = jnp.stack([
        alpha_bottom.astype(jnp.float32),
        beta_bottom.astype(jnp.float32),
        alpha_top.astype(jnp.float32),
        beta_top.astype(jnp.float32),
    ], axis=0)                                         # (4, D)
    params = jnp.tile(params, (1, f))                  # (4, W)

    grid = (rows_padded // tile_rows,)

    out = pl.pallas_call(
        _taaf_kernel,
        out_shape=jax.ShapeDtypeStruct((rows_padded, W), x.dtype),
        grid_spec=pltpu.PrefetchScalarGridSpec(
            num_scalar_prefetch=0,
            grid=grid,
            in_specs=[
                pl.BlockSpec((tile_rows, W), lambda i: (i, 0)),
                pl.BlockSpec((4, W), lambda i: (0, 0)),
            ],
            out_specs=pl.BlockSpec((tile_rows, W), lambda i: (i, 0)),
        ),
        compiler_params=pltpu.CompilerParams(
            dimension_semantics=("parallel",),      # shards across TCs on v7x
            vmem_limit_bytes=64 << 20,
        ),
    )(xf, params)

    out = out.reshape(R_pad, D)[:R]
    return out.reshape(orig_shape)


if __name__ == "__main__":
    key = jax.random.PRNGKey(0)

    B, S, D = 2, 8, 32          # input_dim = 32
    x = jax.random.normal(key, (B, S, D), dtype=jnp.float32)

    # Deterministic parameter init, matching ATU.__init__:
    #   alpha -> ones, beta -> zeros (shape = (input_dim,))
    alpha_bottom = jnp.ones((D,), dtype=jnp.float32)
    beta_bottom = jnp.zeros((D,), dtype=jnp.float32)
    alpha_top = jnp.ones((D,), dtype=jnp.float32)
    beta_top = jnp.zeros((D,), dtype=jnp.float32)

    y = taaf_forward(x, alpha_bottom, beta_bottom, alpha_top, beta_top)
    y = jax.block_until_ready(y)

    # Reference check (pure JAX).
    ref = alpha_top * jnp.tanh(alpha_bottom * x + beta_bottom) + beta_top
    assert y.shape == x.shape
    assert y.dtype == x.dtype
    assert jnp.allclose(y, ref, atol=1e-6, rtol=1e-6), "mismatch vs reference"

    print("KERNEL_OK")
</pallas_src>

<mosaic_0001>
module attributes {stable_mosaic.version = 11 : i64} {
  func.func @_taaf_kernel(%arg0: i32, %arg1: memref<8x128xf32, #tpu.memory_space<vmem>>, %arg2: memref<4x128xf32, #tpu.memory_space<vmem>>, %arg3: memref<8x128xf32, #tpu.memory_space<vmem>>) attributes {dimension_semantics = [#tpu.dimension_semantics<parallel>], iteration_bounds = array<i64: 1>, scalar_prefetch = 0 : i64, scratch_operands = 0 : i64, tpu.core_type = #tpu.core_type<tc>, window_params = [{transform_indices = @transform_0, window_bounds = array<i64: 8, 128>}, {pipeline_mode = #tpu.pipeline_mode<synchronous>, transform_indices = @transform_1, window_bounds = array<i64: 4, 128>}, {transform_indices = @transform_2, window_bounds = array<i64: 8, 128>}]} {
    %c0 = arith.constant 0 : index
    %c0_0 = arith.constant 0 : index
    %0 = vector.load %arg1[%c0, %c0_0] : memref<8x128xf32, #tpu.memory_space<vmem>>, vector<8x128xf32>
    %c0_1 = arith.constant 0 : index
    %c0_2 = arith.constant 0 : index
    %1 = vector.load %arg2[%c0_1, %c0_2] : memref<4x128xf32, #tpu.memory_space<vmem>>, vector<1x128xf32>
    %c1 = arith.constant 1 : index
    %c0_3 = arith.constant 0 : index
    %2 = vector.load %arg2[%c1, %c0_3] : memref<4x128xf32, #tpu.memory_space<vmem>>, vector<1x128xf32>
    %c2 = arith.constant 2 : index
    %c0_4 = arith.constant 0 : index
    %3 = vector.load %arg2[%c2, %c0_4] : memref<4x128xf32, #tpu.memory_space<vmem>>, vector<1x128xf32>
    %c3 = arith.constant 3 : index
    %c0_5 = arith.constant 0 : index
    %4 = vector.load %arg2[%c3, %c0_5] : memref<4x128xf32, #tpu.memory_space<vmem>>, vector<1x128xf32>
    %5 = vector.broadcast %1 : vector<1x128xf32> to vector<8x128xf32>
    %6 = arith.mulf %5, %0 : vector<8x128xf32>
    %7 = vector.broadcast %2 : vector<1x128xf32> to vector<8x128xf32>
    %8 = arith.addf %6, %7 : vector<8x128xf32>
    %9 = math.tanh %8 : vector<8x128xf32>
    %10 = vector.broadcast %3 : vector<1x128xf32> to vector<8x128xf32>
    %11 = arith.mulf %10, %9 : vector<8x128xf32>
    %12 = vector.broadcast %4 : vector<1x128xf32> to vector<8x128xf32>
    %13 = arith.addf %11, %12 : vector<8x128xf32>
    %c0_6 = arith.constant 0 : index
    %c0_7 = arith.constant 0 : index
    %14 = vector.load %arg3[%c0_6, %c0_7] : memref<8x128xf32, #tpu.memory_space<vmem>>, vector<8x128xf32>
    tpu.vector_store %arg3[%c0_6, %c0_7], %13 {strides = array<i32>} : memref<8x128xf32, #tpu.memory_space<vmem>>, vector<8x128xf32>,
    return
  }
  func.func @transform_0(%arg0: i32) -> (i32, i32) {
    %c0_i32 = arith.constant 0 : i32
    %c0_i32_0 = arith.constant 0 : i32
    return %arg0, %c0_i32 : i32, i32
  }
  func.func @transform_1(%arg0: i32) -> (i32, i32) {
    %c0_i32 = arith.constant 0 : i32
    %c0_i32_0 = arith.constant 0 : i32
    %c0_i32_1 = arith.constant 0 : i32
    return %c0_i32, %c0_i32_0 : i32, i32
  }
  func.func @transform_2(%arg0: i32) -> (i32, i32) {
    %c0_i32 = arith.constant 0 : i32
    %c0_i32_0 = arith.constant 0 : i32
    return %arg0, %c0_i32 : i32, i32
  }
}

</mosaic_0001>

<llo_original>
// kernel: tpu_custom_call.1
$region0: #{tpu_custom_call.1}
  #allocation0 [shape = 'u32[]', space=smem, size = 0x4, offset = 0x4, fixed_abs, tag = 'smem constant byte address 0x4 - core index']
  #allocation1 [shape = 'u32[144,128]{1,0:T(1,128)}', space=vmem, size = 0x12000, scoped, tag = 'internal scratch']
  %s0 = inlined_call_operand.hbm [shape: f32[8,128], index: 0, kind: input, shape index: {}]
  %s1 = inlined_call_operand.hbm [shape: f32[4,128], index: 1, kind: input, shape index: {}]
  %s2 = inlined_call_operand.hbm [shape: f32[8,128], index: 2, kind: output, shape index: {}]
  %s3 = sld [smem:[#allocation0]]
  $region26: #{tpu_custom_call.1} parent=0
    _
  %s5 = ssub.s32 1, %s3
  %s6 = scalar_select 0, %s5, %s3
  $region1: #{tpu_custom_call.1} parent=0
    #allocation2 [shape = 'u8[4096]{0}', space=vmem, size = 0x1000, scoped, tag = 'input window, operand 0, single buffered']
    #allocation3 [shape = 's32[1]{0}', space=sflag, size = 0x4, scoped, tag = 'scoped memory for tpu_custom_call.1']
    #allocation4 [shape = 's32[1]{0}', space=sflag, size = 0x4, scoped, tag = 'scoped memory for tpu_custom_call.1']
    #allocation5 [shape = 'u8[2048]{0}', space=vmem, size = 0x800, scoped, tag = 'input window, operand 1, single buffered']
    #allocation6 [shape = 's32[1]{0}', space=sflag, size = 0x4, scoped, tag = 'scoped memory for tpu_custom_call.1']
    #allocation7 [shape = 'u8[4096]{0}', space=vmem, size = 0x1000, scoped, tag = 'output window, operand 0, single buffered']
    %7 = vsyncpa [#allocation3], 0
    %8 = vsyncpa [#allocation6], 0
    %9 = vsyncpa [#allocation4], 0
    // Predicated region
    $region2: #{tpu_custom_call.1} parent=1 // pred_check
      _
    $region3: #{tpu_custom_call.1} parent=1 // pred_check_branch
      %11 = sbr.rel (0) target = $region5
    $region4: #{tpu_custom_call.1} parent=1 // pred_region
      %s13 = ssub.s32 128, 128
      %14 = vsyncadd [#allocation3], %s13
      %s16 = sshll.u32 [#allocation2], 4
      %s17 = int_to_ptr.vmem [resolvable:$true] %s16
      %19 = dma.hbm_to_vmem [thread:$0]  %s0, 128, %s17, [#allocation3]
    $region5: #{tpu_custom_call.1} parent=1 // pred_fallthru
      _
    // Predicated region
    $region6: #{tpu_custom_call.1} parent=1 // pred_check
      _
    $region7: #{tpu_custom_call.1} parent=1 // pred_check_branch
      %21 = sbr.rel (0) target = $region9
    $region8: #{tpu_custom_call.1} parent=1 // pred_region
      %s23 = ssub.s32 64, 64
      %24 = vsyncadd [#allocation6], %s23
      %s26 = sshll.u32 [#allocation5], 4
      %s27 = int_to_ptr.vmem [resolvable:$true] %s26
      %29 = dma.hbm_to_vmem [thread:$0]  %s1, 64, %s27, [#allocation6]
    $region9: #{tpu_custom_call.1} parent=1 // pred_fallthru
      _
    // Predicated region
    $region10: #{tpu_custom_call.1} parent=1 // pred_check
      _
    $region11: #{tpu_custom_call.1} parent=1 // pred_check_branch
      %31 = sbr.rel (0) target = $region13
    $region12: #{tpu_custom_call.1} parent=1 // pred_region
      %32 = dma.done [#allocation3], 128
    $region13: #{tpu_custom_call.1} parent=1 // pred_fallthru
      _
    // Predicated region
    $region14: #{tpu_custom_call.1} parent=1 // pred_check
      _
    $region15: #{tpu_custom_call.1} parent=1 // pred_check_branch
      %34 = sbr.rel (0) target = $region17
    $region16: #{tpu_custom_call.1} parent=1 // pred_region
      %35 = dma.done [#allocation6], 64
    $region17: #{tpu_custom_call.1} parent=1 // pred_fallthru
      _
    %v36 = vld [vmem:[#allocation2] sm:$0xff]
    %v37 = vld [vmem:[#allocation5] sm:$0x1]
    %v38 = vld [vmem:[#allocation5 + $0x1] sm:$0x1]
    %v39 = vld [vmem:[#allocation5 + $0x2] sm:$0x1]
    %v40 = vld [vmem:[#allocation5 + $0x3] sm:$0x1]
    %v41 = vlaneseq
    %v42 = vshrl.u32 %v41, 7
    %v43 = vsub.s32 0, %v42
    %v44 = vrot.slane %v37, %v43
    %v45 = vmul.f32 %v44, %v36
    %v46 = vlaneseq
    %v47 = vshrl.u32 %v46, 7
    %v48 = vsub.s32 0, %v47
    %v49 = vrot.slane %v38, %v48
    %v50 = vadd.f32 %v45, %v49
    %v51 = vtanh.pop %v50
    %v52 = vlaneseq
    %v53 = vshrl.u32 %v52, 7
    %v54 = vsub.s32 0, %v53
    %v55 = vrot.slane %v39, %v54
    %v56 = vmul.f32 %v55, %v51
    %v57 = vlaneseq
    %v58 = vshrl.u32 %v57, 7
    %v59 = vsub.s32 0, %v58
    %v60 = vrot.slane %v40, %v59
    %v61 = vadd.f32 %v56, %v60
    %62 = vst [vmem:[#allocation7] sm:$0xff] %v61
    // Predicated region
    $region18: #{tpu_custom_call.1} parent=1 // pred_check
      _
    $region19: #{tpu_custom_call.1} parent=1 // pred_check_branch
      %64 = sbr.rel (0) target = $region21
    $region20: #{tpu_custom_call.1} parent=1 // pred_region
      %s66 = ssub.s32 128, 128
      %67 = vsyncadd [#allocation4], %s66
      %s69 = sshll.u32 [#allocation7], 4
      %s70 = int_to_ptr.vmem [resolvable:$true] %s69
      %72 = dma.vmem_to_hbm [thread:$0]  %s70, 128, %s2, [#allocation4]
    $region21: #{tpu_custom_call.1} parent=1 // pred_fallthru
      _
    // Predicated region
    $region22: #{tpu_custom_call.1} parent=1 // pred_check
      _
    $region23: #{tpu_custom_call.1} parent=1 // pred_check_branch
      %74 = sbr.rel (0) target = $region25
    $region24: #{tpu_custom_call.1} parent=1 // pred_region
      %75 = dma.done [#allocation4], 128
    $region25: #{tpu_custom_call.1} parent=1 // pred_fallthru
      _
    %76 = vsyncpa [#allocation3], 1
    %77 = vsyncpa [#allocation6], 1
    %78 = vsyncpa [#allocation4], 1

</llo_original>
